<compile_context>
chip_gen: v5e
topology: v5e:2x2
jax: 0.10.0
libtpu: 0.0.40
codegen_flags: <defaults>
</compile_context>

<pallas_src>
import math
from functools import partial

import jax
import jax.numpy as jnp
from jax.experimental import pallas as pl
from jax.experimental.pallas import tpu as pltpu


# ----------------------------------------------------------------------------
# Fused GhostModule kernel: x (Cin, HW) -> out (oup, HW), batch_block images
# per grid step.
# ----------------------------------------------------------------------------
def _make_ghost_kernel(H, W, Cin, init_c, oup, tot_c, dw_size, relu,
                       batch_block, use_mxu):
    HW = H * W
    p = dw_size // 2
    # Flattened-index offset of each depthwise tap (dy, dx), row-major.
    offs = [(dy - p) * W + (dx - p) for dy in range(dw_size) for dx in range(dw_size)]
    t_center = p * dw_size + p            # off == 0 tap (mask is all ones there)

    def kernel(x_ref, w1_ref, b1_ref, coeff_ref, b2_ref, o_ref):
        for b in range(batch_block):       # static, unrolled
            x = x_ref[b]                    # (Cin, HW)

            # --- primary 1x1 conv (BN folded) + bias + ReLU ------------------
            if use_mxu:
                xall = jnp.dot(w1_ref[...], x, preferred_element_type=jnp.float32)
            else:
                # Tiny contraction (Cin ~ 4): VPU broadcast-FMA, MXU stays idle
                # and the vector-extended slot is free for the rolls below.
                xall = w1_ref[:, 0:1] * x[0:1, :]
                for k in range(1, Cin):
                    xall = xall + w1_ref[:, k:k + 1] * x[k:k + 1, :]
            xall = xall + b1_ref[...]       # (tot_c, HW)
            if relu:
                xall = jnp.maximum(xall, 0.0)

            if tot_c == init_c:             # ratio == 2: depthwise input is x1
                x1 = xall
                x1r = xall
            else:                           # replication folded into w1 rows
                x1 = xall[:init_c]
                x1r = xall[init_c:]

            # --- cheap op: depthwise kxk via static lane rolls (XLU slot) ----
            # coeff[t] = border_mask[t] * w2[t] (precomputed in the wrapper),
            # so each tap is one mul + one add; center tap seeds the acc.
            acc = x1r * coeff_ref[t_center]
            for t, off in enumerate(offs):
                if t == t_center:
                    continue
                shifted = pltpu.roll(x1r, (-off) % HW, axis=1)
                acc = acc + shifted * coeff_ref[t]
            x2 = acc + b2_ref[...]          # (new_c, HW)
            if relu:
                x2 = jnp.maximum(x2, 0.0)

            # --- concat + slice realized as two direct lane-dense stores -----
            o_ref[b, 0:init_c, :] = x1.astype(o_ref.dtype)
            if oup > init_c:
                o_ref[b, init_c:oup, :] = x2[: oup - init_c].astype(o_ref.dtype)

    return kernel


@partial(jax.jit, static_argnames=("oup", "ratio", "relu", "batch_block"))
def ghost_module_forward(x_nchw, params, *, oup, ratio=2, relu=True,
                         batch_block=1):
    eps = 1e-5
    N, Cin, H, W = x_nchw.shape
    HW = H * W
    init_c = math.ceil(oup / ratio)
    new_c = init_c * (ratio - 1)
    dw_size = params["w2"].shape[-1]
    p = dw_size // 2
    assert N % batch_block == 0, (N, batch_block)

    # ---- fold eval-mode BN into conv weights / biases (free wrapper work) ----
    s1 = params["g1"] / jnp.sqrt(params["v1"] + eps)
    c1 = params["beta1"] - params["m1"] * s1
    s2 = params["g2"] / jnp.sqrt(params["v2"] + eps)
    c2 = params["beta2"] - params["m2"] * s2
    w1s = params["w1"] * s1[:, None]                         # (init_c, Cin)
    w2s = params["w2"] * s2[:, None, None]                   # (new_c, k, k)

    # ---- ratio != 2: fold group->channel replication into duplicated rows ----
    if ratio == 2:
        w1_all = w1s                                         # (init_c, Cin)
        b1_all = c1[:, None]
    else:
        rep = jnp.array([o // (ratio - 1) for o in range(new_c)], dtype=jnp.int32)
        w1_all = jnp.concatenate([w1s, w1s[rep]], axis=0)    # (init_c+new_c, Cin)
        b1_all = jnp.concatenate([c1, c1[rep]], axis=0)[:, None]
    tot_c = int(w1_all.shape[0])
    b2 = c2[:, None]                                         # (new_c, 1)

    # ---- per-tap border masks folded with depthwise weights -> coeff ---------
    hh = jnp.arange(HW, dtype=jnp.int32) // W
    ww = jnp.arange(HW, dtype=jnp.int32) % W
    masks = []
    for dy in range(dw_size):
        for dx in range(dw_size):
            ok = ((hh + dy - p >= 0) & (hh + dy - p < H)
                  & (ww + dx - p >= 0) & (ww + dx - p < W))
            masks.append(ok)
    mask = jnp.stack(masks).astype(jnp.float32)              # (k*k, HW)
    w2_t = jnp.transpose(w2s.reshape(new_c, dw_size * dw_size))  # (k*k, new_c)
    coeff = w2_t[:, :, None] * mask[:, None, :]              # (k*k, new_c, HW)

    x3 = x_nchw.reshape(N, Cin, HW)      # free reshape (NCHW is channels-first)

    use_mxu = Cin >= 64                  # static path selection
    Nb = batch_block

    kernel = _make_ghost_kernel(H, W, Cin, init_c, oup, tot_c, dw_size, relu,
                                Nb, use_mxu)
    out = pl.pallas_call(
        kernel,
        out_shape=jax.ShapeDtypeStruct((N, oup, HW), jnp.float32),
        grid_spec=pltpu.PrefetchScalarGridSpec(
            num_scalar_prefetch=0,
            grid=(N // Nb,),
            in_specs=[
                pl.BlockSpec((Nb, Cin, HW), lambda n: (n, 0, 0)),
                pl.BlockSpec((tot_c, Cin), lambda n: (0, 0)),
                pl.BlockSpec((tot_c, 1), lambda n: (0, 0)),
                pl.BlockSpec((dw_size * dw_size, new_c, HW), lambda n: (0, 0, 0)),
                pl.BlockSpec((new_c, 1), lambda n: (0, 0)),
            ],
            out_specs=pl.BlockSpec((Nb, oup, HW), lambda n: (n, 0, 0)),
        ),
        compiler_params=pltpu.CompilerParams(
            dimension_semantics=("parallel",)),
    )(x3, w1_all, b1_all, coeff, b2)
    return out.reshape(N, oup, H, W)


# ----------------------------------------------------------------------------
# Pure-JAX reference (lax.conv) for verification.
# ----------------------------------------------------------------------------
def ghost_module_reference(x_nchw, params, *, oup, ratio=2, relu=True):
    eps = 1e-5
    s1 = params["g1"] / jnp.sqrt(params["v1"] + eps)
    c1 = params["beta1"] - params["m1"] * s1
    s2 = params["g2"] / jnp.sqrt(params["v2"] + eps)
    c2 = params["beta2"] - params["m2"] * s2

    w1 = params["w1"][:, :, None, None]                      # (init_c, Cin, 1, 1)
    y1 = jax.lax.conv_general_dilated(
        x_nchw, w1, (1, 1), "VALID", dimension_numbers=("NCHW", "OIHW", "NCHW"))
    y1 = y1 * s1[None, :, None, None] + c1[None, :, None, None]
    if relu:
        y1 = jnp.maximum(y1, 0.0)

    init_c = w1.shape[0]
    k = params["w2"].shape[-1]
    pad = k // 2
    w2 = params["w2"][:, None, :, :]                          # (new_c, 1, k, k)
    y2 = jax.lax.conv_general_dilated(
        y1, w2, (1, 1), ((pad, pad), (pad, pad)),
        dimension_numbers=("NCHW", "OIHW", "NCHW"),
        feature_group_count=init_c)
    y2 = y2 * s2[None, :, None, None] + c2[None, :, None, None]
    if relu:
        y2 = jnp.maximum(y2, 0.0)
    return jnp.concatenate([y1, y2], axis=1)[:, :oup]


if __name__ == "__main__":
    # GhostModule defaults: kernel_size=1, ratio=2, dw_size=3, stride=1, relu=True
    N, inp, H, W = 2, 4, 16, 16
    oup, ratio, dw_size = 8, 2, 3
    init_c = math.ceil(oup / ratio)           # 4
    new_c = init_c * (ratio - 1)              # 4

    key = jax.random.PRNGKey(0)
    ks = jax.random.split(key, 11)

    w1 = 0.1 * jax.random.normal(ks[0], (init_c, inp), jnp.float32)         # 1x1 conv
    w2 = 0.1 * jax.random.normal(ks[1], (new_c, dw_size, dw_size), jnp.float32)
    g1 = 1.0 + 0.1 * jax.random.normal(ks[2], (init_c,), jnp.float32)
    beta1 = 0.1 * jax.random.normal(ks[3], (init_c,), jnp.float32)
    m1 = 0.1 * jax.random.normal(ks[4], (init_c,), jnp.float32)
    v1 = 0.5 + jnp.abs(jax.random.normal(ks[5], (init_c,), jnp.float32))
    g2 = 1.0 + 0.1 * jax.random.normal(ks[6], (new_c,), jnp.float32)
    beta2 = 0.1 * jax.random.normal(ks[7], (new_c,), jnp.float32)
    m2 = 0.1 * jax.random.normal(ks[8], (new_c,), jnp.float32)
    v2 = 0.5 + jnp.abs(jax.random.normal(ks[9], (new_c,), jnp.float32))

    params = dict(w1=w1, w2=w2, g1=g1, beta1=beta1, m1=m1, v1=v1,
                  g2=g2, beta2=beta2, m2=m2, v2=v2)

    x = jax.random.normal(ks[10], (N, inp, H, W), jnp.float32)   # NCHW, like PyTorch

    out = jax.block_until_ready(ghost_module_forward(x, params, oup=oup, ratio=ratio))
    ref = jax.block_until_ready(ghost_module_reference(x, params, oup=oup, ratio=ratio))

    assert out.shape == (N, oup, H, W), out.shape
    err = float(jnp.max(jnp.abs(out - ref)))
    assert err < 1e-4, err
    print("KERNEL_OK")
</pallas_src>

<mosaic_0001>
module attributes {stable_mosaic.version = 11 : i64} {
  func.func @kernel(%arg0: i32, %arg1: memref<1x4x256xf32, #tpu.memory_space<vmem>>, %arg2: memref<4x4xf32, #tpu.memory_space<vmem>>, %arg3: memref<4x1xf32, #tpu.memory_space<vmem>>, %arg4: memref<9x4x256xf32, #tpu.memory_space<vmem>>, %arg5: memref<4x1xf32, #tpu.memory_space<vmem>>, %arg6: memref<1x8x256xf32, #tpu.memory_space<vmem>>) attributes {dimension_semantics = [#tpu.dimension_semantics<parallel>], iteration_bounds = array<i64: 2>, scalar_prefetch = 0 : i64, scratch_operands = 0 : i64, tpu.core_type = #tpu.core_type<tc>, window_params = [{transform_indices = @transform_0, window_bounds = array<i64: 1, 4, 256>}, {pipeline_mode = #tpu.pipeline_mode<synchronous>, transform_indices = @transform_1, window_bounds = array<i64: 4, 4>}, {pipeline_mode = #tpu.pipeline_mode<synchronous>, transform_indices = @transform_2, window_bounds = array<i64: 4, 1>}, {pipeline_mode = #tpu.pipeline_mode<synchronous>, transform_indices = @transform_3, window_bounds = array<i64: 9, 4, 256>}, {pipeline_mode = #tpu.pipeline_mode<synchronous>, transform_indices = @transform_4, window_bounds = array<i64: 4, 1>}, {transform_indices = @transform_5, window_bounds = array<i64: 1, 8, 256>}]} {
    %c0 = arith.constant 0 : index
    %c0_0 = arith.constant 0 : index
    %c0_1 = arith.constant 0 : index
    %0 = vector.load %arg1[%c0, %c0_0, %c0_1] : memref<1x4x256xf32, #tpu.memory_space<vmem>>, vector<1x4x256xf32>
    %1 = vector.shape_cast %0 : vector<1x4x256xf32> to vector<4x256xf32>
    %c0_2 = arith.constant 0 : index
    %c0_3 = arith.constant 0 : index
    %2 = vector.load %arg2[%c0_2, %c0_3] : memref<4x4xf32, #tpu.memory_space<vmem>>, vector<4x1xf32>
    %3 = vector.extract_strided_slice %1 {offsets = [0, 0], sizes = [1, 256], strides = [1, 1]} : vector<4x256xf32> to vector<1x256xf32>
    %4 = vector.broadcast %2 : vector<4x1xf32> to vector<4x256xf32>
    %5 = vector.broadcast %3 : vector<1x256xf32> to vector<4x256xf32>
    %6 = arith.mulf %4, %5 : vector<4x256xf32>
    %c0_4 = arith.constant 0 : index
    %c1 = arith.constant 1 : index
    %7 = vector.load %arg2[%c0_4, %c1] : memref<4x4xf32, #tpu.memory_space<vmem>>, vector<4x1xf32>
    %8 = vector.extract_strided_slice %1 {offsets = [1, 0], sizes = [1, 256], strides = [1, 1]} : vector<4x256xf32> to vector<1x256xf32>
    %9 = vector.broadcast %7 : vector<4x1xf32> to vector<4x256xf32>
    %10 = vector.broadcast %8 : vector<1x256xf32> to vector<4x256xf32>
    %11 = arith.mulf %9, %10 : vector<4x256xf32>
    %12 = arith.addf %6, %11 : vector<4x256xf32>
    %c0_5 = arith.constant 0 : index
    %c2 = arith.constant 2 : index
    %13 = vector.load %arg2[%c0_5, %c2] : memref<4x4xf32, #tpu.memory_space<vmem>>, vector<4x1xf32>
    %14 = vector.extract_strided_slice %1 {offsets = [2, 0], sizes = [1, 256], strides = [1, 1]} : vector<4x256xf32> to vector<1x256xf32>
    %15 = vector.broadcast %13 : vector<4x1xf32> to vector<4x256xf32>
    %16 = vector.broadcast %14 : vector<1x256xf32> to vector<4x256xf32>
    %17 = arith.mulf %15, %16 : vector<4x256xf32>
    %18 = arith.addf %12, %17 : vector<4x256xf32>
    %c0_6 = arith.constant 0 : index
    %c3 = arith.constant 3 : index
    %19 = vector.load %arg2[%c0_6, %c3] : memref<4x4xf32, #tpu.memory_space<vmem>>, vector<4x1xf32>
    %20 = vector.extract_strided_slice %1 {offsets = [3, 0], sizes = [1, 256], strides = [1, 1]} : vector<4x256xf32> to vector<1x256xf32>
    %21 = vector.broadcast %19 : vector<4x1xf32> to vector<4x256xf32>
    %22 = vector.broadcast %20 : vector<1x256xf32> to vector<4x256xf32>
    %23 = arith.mulf %21, %22 : vector<4x256xf32>
    %24 = arith.addf %18, %23 : vector<4x256xf32>
    %c0_7 = arith.constant 0 : index
    %c0_8 = arith.constant 0 : index
    %25 = vector.load %arg3[%c0_7, %c0_8] : memref<4x1xf32, #tpu.memory_space<vmem>>, vector<4x1xf32>
    %26 = vector.broadcast %25 : vector<4x1xf32> to vector<4x256xf32>
    %27 = arith.addf %24, %26 : vector<4x256xf32>
    %cst = arith.constant 0.000000e+00 : f32
    %28 = vector.broadcast %cst : f32 to vector<4x256xf32>
    %29 = arith.maximumf %27, %28 : vector<4x256xf32>
    %c4 = arith.constant 4 : index
    %c0_9 = arith.constant 0 : index
    %c0_10 = arith.constant 0 : index
    %30 = vector.load %arg4[%c4, %c0_9, %c0_10] : memref<9x4x256xf32, #tpu.memory_space<vmem>>, vector<1x4x256xf32>
    %31 = vector.shape_cast %30 : vector<1x4x256xf32> to vector<4x256xf32>
    %32 = arith.mulf %29, %31 : vector<4x256xf32>
    %c17_i32 = arith.constant 17 : i32
    %33 = tpu.dynamic_rotate %29 by %c17_i32 dim 1 : vector<4x256xf32>, i32 -> vector<4x256xf32>
    %c0_11 = arith.constant 0 : index
    %c0_12 = arith.constant 0 : index
    %c0_13 = arith.constant 0 : index
    %34 = vector.load %arg4[%c0_11, %c0_12, %c0_13] : memref<9x4x256xf32, #tpu.memory_space<vmem>>, vector<1x4x256xf32>
    %35 = vector.shape_cast %34 : vector<1x4x256xf32> to vector<4x256xf32>
    %36 = arith.mulf %33, %35 : vector<4x256xf32>
    %37 = arith.addf %32, %36 : vector<4x256xf32>
    %c16_i32 = arith.constant 16 : i32
    %38 = tpu.dynamic_rotate %29 by %c16_i32 dim 1 : vector<4x256xf32>, i32 -> vector<4x256xf32>
    %c1_14 = arith.constant 1 : index
    %c0_15 = arith.constant 0 : index
    %c0_16 = arith.constant 0 : index
    %39 = vector.load %arg4[%c1_14, %c0_15, %c0_16] : memref<9x4x256xf32, #tpu.memory_space<vmem>>, vector<1x4x256xf32>
    %40 = vector.shape_cast %39 : vector<1x4x256xf32> to vector<4x256xf32>
    %41 = arith.mulf %38, %40 : vector<4x256xf32>
    %42 = arith.addf %37, %41 : vector<4x256xf32>
    %c15_i32 = arith.constant 15 : i32
    %43 = tpu.dynamic_rotate %29 by %c15_i32 dim 1 : vector<4x256xf32>, i32 -> vector<4x256xf32>
    %c2_17 = arith.constant 2 : index
    %c0_18 = arith.constant 0 : index
    %c0_19 = arith.constant 0 : index
    %44 = vector.load %arg4[%c2_17, %c0_18, %c0_19] : memref<9x4x256xf32, #tpu.memory_space<vmem>>, vector<1x4x256xf32>
    %45 = vector.shape_cast %44 : vector<1x4x256xf32> to vector<4x256xf32>
    %46 = arith.mulf %43, %45 : vector<4x256xf32>
    %47 = arith.addf %42, %46 : vector<4x256xf32>
    %c1_i32 = arith.constant 1 : i32
    %48 = tpu.dynamic_rotate %29 by %c1_i32 dim 1 : vector<4x256xf32>, i32 -> vector<4x256xf32>
    %c3_20 = arith.constant 3 : index
    %c0_21 = arith.constant 0 : index
    %c0_22 = arith.constant 0 : index
    %49 = vector.load %arg4[%c3_20, %c0_21, %c0_22] : memref<9x4x256xf32, #tpu.memory_space<vmem>>, vector<1x4x256xf32>
    %50 = vector.shape_cast %49 : vector<1x4x256xf32> to vector<4x256xf32>
    %51 = arith.mulf %48, %50 : vector<4x256xf32>
    %52 = arith.addf %47, %51 : vector<4x256xf32>
    %c255_i32 = arith.constant 255 : i32
    %53 = tpu.dynamic_rotate %29 by %c255_i32 dim 1 : vector<4x256xf32>, i32 -> vector<4x256xf32>
    %c5 = arith.constant 5 : index
    %c0_23 = arith.constant 0 : index
    %c0_24 = arith.constant 0 : index
    %54 = vector.load %arg4[%c5, %c0_23, %c0_24] : memref<9x4x256xf32, #tpu.memory_space<vmem>>, vector<1x4x256xf32>
    %55 = vector.shape_cast %54 : vector<1x4x256xf32> to vector<4x256xf32>
    %56 = arith.mulf %53, %55 : vector<4x256xf32>
    %57 = arith.addf %52, %56 : vector<4x256xf32>
    %c241_i32 = arith.constant 241 : i32
    %58 = tpu.dynamic_rotate %29 by %c241_i32 dim 1 : vector<4x256xf32>, i32 -> vector<4x256xf32>
    %c6 = arith.constant 6 : index
    %c0_25 = arith.constant 0 : index
    %c0_26 = arith.constant 0 : index
    %59 = vector.load %arg4[%c6, %c0_25, %c0_26] : memref<9x4x256xf32, #tpu.memory_space<vmem>>, vector<1x4x256xf32>
    %60 = vector.shape_cast %59 : vector<1x4x256xf32> to vector<4x256xf32>
    %61 = arith.mulf %58, %60 : vector<4x256xf32>
    %62 = arith.addf %57, %61 : vector<4x256xf32>
    %c240_i32 = arith.constant 240 : i32
    %63 = tpu.dynamic_rotate %29 by %c240_i32 dim 1 : vector<4x256xf32>, i32 -> vector<4x256xf32>
    %c7 = arith.constant 7 : index
    %c0_27 = arith.constant 0 : index
    %c0_28 = arith.constant 0 : index
    %64 = vector.load %arg4[%c7, %c0_27, %c0_28] : memref<9x4x256xf32, #tpu.memory_space<vmem>>, vector<1x4x256xf32>
    %65 = vector.shape_cast %64 : vector<1x4x256xf32> to vector<4x256xf32>
    %66 = arith.mulf %63, %65 : vector<4x256xf32>
    %67 = arith.addf %62, %66 : vector<4x256xf32>
    %c239_i32 = arith.constant 239 : i32
    %68 = tpu.dynamic_rotate %29 by %c239_i32 dim 1 : vector<4x256xf32>, i32 -> vector<4x256xf32>
    %c8 = arith.constant 8 : index
    %c0_29 = arith.constant 0 : index
    %c0_30 = arith.constant 0 : index
    %69 = vector.load %arg4[%c8, %c0_29, %c0_30] : memref<9x4x256xf32, #tpu.memory_space<vmem>>, vector<1x4x256xf32>
    %70 = vector.shape_cast %69 : vector<1x4x256xf32> to vector<4x256xf32>
    %71 = arith.mulf %68, %70 : vector<4x256xf32>
    %72 = arith.addf %67, %71 : vector<4x256xf32>
    %c0_31 = arith.constant 0 : index
    %c0_32 = arith.constant 0 : index
    %73 = vector.load %arg5[%c0_31, %c0_32] : memref<4x1xf32, #tpu.memory_space<vmem>>, vector<4x1xf32>
    %74 = vector.broadcast %73 : vector<4x1xf32> to vector<4x256xf32>
    %75 = arith.addf %72, %74 : vector<4x256xf32>
    %cst_33 = arith.constant 0.000000e+00 : f32
    %76 = vector.broadcast %cst_33 : f32 to vector<4x256xf32>
    %77 = arith.maximumf %75, %76 : vector<4x256xf32>
    %c0_34 = arith.constant 0 : index
    %c0_35 = arith.constant 0 : index
    %c0_36 = arith.constant 0 : index
    %78 = vector.load %arg6[%c0_34, %c0_35, %c0_36] : memref<1x8x256xf32, #tpu.memory_space<vmem>>, vector<1x4x256xf32>
    %79 = vector.shape_cast %78 : vector<1x4x256xf32> to vector<4x256xf32>
    %80 = vector.shape_cast %29 : vector<4x256xf32> to vector<1x4x256xf32>
    tpu.vector_store %arg6[%c0_34, %c0_35, %c0_36], %80 {strides = array<i32>} : memref<1x8x256xf32, #tpu.memory_space<vmem>>, vector<1x4x256xf32>,
    %c0_37 = arith.constant 0 : index
    %c4_38 = arith.constant 4 : index
    %c0_39 = arith.constant 0 : index
    %81 = vector.load %arg6[%c0_37, %c4_38, %c0_39] : memref<1x8x256xf32, #tpu.memory_space<vmem>>, vector<1x4x256xf32>
    %82 = vector.shape_cast %81 : vector<1x4x256xf32> to vector<4x256xf32>
    %83 = vector.shape_cast %77 : vector<4x256xf32> to vector<1x4x256xf32>
    tpu.vector_store %arg6[%c0_37, %c4_38, %c0_39], %83 {strides = array<i32>} : memref<1x8x256xf32, #tpu.memory_space<vmem>>, vector<1x4x256xf32>,
    return
  }
  func.func @transform_0(%arg0: i32) -> (i32, i32, i32) {
    %c0_i32 = arith.constant 0 : i32
    %c0_i32_0 = arith.constant 0 : i32
    %c0_i32_1 = arith.constant 0 : i32
    return %arg0, %c0_i32, %c0_i32_0 : i32, i32, i32
  }
  func.func @transform_1(%arg0: i32) -> (i32, i32) {
    %c0_i32 = arith.constant 0 : i32
    %c0_i32_0 = arith.constant 0 : i32
    %c0_i32_1 = arith.constant 0 : i32
    return %c0_i32, %c0_i32_0 : i32, i32
  }
  func.func @transform_2(%arg0: i32) -> (i32, i32) {
    %c0_i32 = arith.constant 0 : i32
    %c0_i32_0 = arith.constant 0 : i32
    %c0_i32_1 = arith.constant 0 : i32
    return %c0_i32, %c0_i32_0 : i32, i32
  }
  func.func @transform_3(%arg0: i32) -> (i32, i32, i32) {
    %c0_i32 = arith.constant 0 : i32
    %c0_i32_0 = arith.constant 0 : i32
    %c0_i32_1 = arith.constant 0 : i32
    %c0_i32_2 = arith.constant 0 : i32
    return %c0_i32, %c0_i32_0, %c0_i32_1 : i32, i32, i32
  }
  func.func @transform_4(%arg0: i32) -> (i32, i32) {
    %c0_i32 = arith.constant 0 : i32
    %c0_i32_0 = arith.constant 0 : i32
    %c0_i32_1 = arith.constant 0 : i32
    return %c0_i32, %c0_i32_0 : i32, i32
  }
  func.func @transform_5(%arg0: i32) -> (i32, i32, i32) {
    %c0_i32 = arith.constant 0 : i32
    %c0_i32_0 = arith.constant 0 : i32
    %c0_i32_1 = arith.constant 0 : i32
    return %arg0, %c0_i32, %c0_i32_0 : i32, i32, i32
  }
}

</mosaic_0001>

<llo_original>
// kernel: ghost_module_forward.1
$region0: #{ghost_module_forward.1}
  #allocation0 [shape = 'u32[]', space=smem, size = 0x4, offset = 0x4, fixed_abs, tag = 'smem constant byte address 0x4 - core index']
  #allocation1 [shape = 'u32[72,128]{1,0:T(1,128)}', space=vmem, size = 0x9000, scoped, tag = 'internal scratch']
  %s0 = inlined_call_operand.vmem [shape: f32[2,4,256], index: 0, kind: input, shape index: {}]
  %s1 = inlined_call_operand.vmem [shape: f32[4,4], index: 1, kind: input, shape index: {}]
  %s2 = inlined_call_operand.vmem [shape: f32[4,1], index: 2, kind: input, shape index: {}]
  %s3 = inlined_call_operand.vmem [shape: f32[9,4,256], index: 3, kind: input, shape index: {}]
  %s4 = inlined_call_operand.vmem [shape: f32[4,1], index: 4, kind: input, shape index: {}]
  %s5 = inlined_call_operand.vmem [shape: f32[2,8,256], index: 5, kind: output, shape index: {}]
  %s6 = sld [smem:[#allocation0]]
  $region53: #{ghost_module_forward.1} parent=0
    _
  %s8 = ssub.s32 1, %s6
  %s9 = scalar_select 0, %s8, %s6
  loop: start=0, step=1, limit=4
  $region2: #{ghost_module_forward.1} parent=0 // loop_pre_header
    _
  $region3: #{ghost_module_forward.1} parent=0 // loop_header
    %s11 = sphi 0, %s15
    %p12 = scmp.ge.s32.totalorder %s11, 4
    %s21 = sphi 0, %s23
    %s24 = sphi 0, %s21
    %s25 = sphi 0, %s24
    %s41 = sphi 0, %s25
    %s45 = sphi 0, %s45
    %s47 = sphi 0, %s45
    %s48 = sphi 0, %s47
    %s62 = sphi 0, %s48
    %s66 = sphi 0, %s66
    %s68 = sphi 0, %s66
    %s69 = sphi 0, %s68
    %s83 = sphi 0, %s69
    %s87 = sphi 0, %s87
    %s89 = sphi 0, %s87
    %s90 = sphi 0, %s89
    %s104 = sphi 0, %s90
    %s108 = sphi 0, %s108
    %s110 = sphi 0, %s108
    %s111 = sphi 0, %s110
    %s125 = sphi 0, %s111
    %s131 = sphi 0, %s133
    %s134 = sphi 0, %s131
    %s135 = sphi 0, %s134
    %s151 = sphi 0, %s135
  $region4: #{ghost_module_forward.1} parent=0 // loop_header_branch
    %14 = sbr.rel (%p12) target = $region8
  $region5: #{ghost_module_forward.1} parent=0 // loop_body
    %s16 = ssub.s32 %s11, 1
    %s17 = ssub.s32 %s11, 2
    %s18 = sadd.s32 %s11, 1
    %s19 = ssub.s32 %s11, %s18
    %p20 = scmp.eq.s32.totalorder %s19, 0
    %s22 = sadd.s32 %s21, 1
    %s23 = scalar_select %p20, %s21, %s22
    %p26 = pneg %p20
    %p27 = scmp.eq.s32.totalorder %s11, 1
    %p28 = por %p26, %p27
    %p29 = scmp.ne.s32.totalorder %s21, %s24
    %p30 = scmp.eq.s32.totalorder %s11, 0
    %p31 = por %p29, %p30
    %p32 = scmp.ne.s32.totalorder %s21, %s24
    %p33 = scmp.eq.s32.totalorder %s16, 1
    %p34 = por %p32, %p33
    %p35 = scmp.ne.s32.totalorder %s24, %s25
    %p36 = scmp.eq.s32.totalorder %s16, 0
    %p37 = por %p35, %p36
    %p38 = scmp.ne.s32.totalorder %s24, %s25
    %p39 = scmp.eq.s32.totalorder %s17, 1
    %p40 = por %p38, %p39
    %p42 = scmp.ne.s32.totalorder %s25, %s41
    %p43 = scmp.eq.s32.totalorder %s17, 0
    %p44 = por %p42, %p43
    %s46 = sadd.s32 %s45, 1
    %p49 = scmp.eq.s32.totalorder %s11, 1
    %p50 = scmp.ne.s32.totalorder %s45, %s47
    %p51 = scmp.eq.s32.totalorder %s11, 0
    %p52 = por %p50, %p51
    %p53 = scmp.ne.s32.totalorder %s45, %s47
    %p54 = scmp.eq.s32.totalorder %s16, 1
    %p55 = por %p53, %p54
    %p56 = scmp.ne.s32.totalorder %s47, %s48
    %p57 = scmp.eq.s32.totalorder %s16, 0
    %p58 = por %p56, %p57
    %p59 = scmp.ne.s32.totalorder %s47, %s48
    %p60 = scmp.eq.s32.totalorder %s17, 1
    %p61 = por %p59, %p60
    %p63 = scmp.ne.s32.totalorder %s48, %s62
    %p64 = scmp.eq.s32.totalorder %s17, 0
    %p65 = por %p63, %p64
    %s67 = sadd.s32 %s66, 1
    %p70 = scmp.eq.s32.totalorder %s11, 1
    %p71 = scmp.ne.s32.totalorder %s66, %s68
    %p72 = scmp.eq.s32.totalorder %s11, 0
    %p73 = por %p71, %p72
    %p74 = scmp.ne.s32.totalorder %s66, %s68
    %p75 = scmp.eq.s32.totalorder %s16, 1
    %p76 = por %p74, %p75
    %p77 = scmp.ne.s32.totalorder %s68, %s69
    %p78 = scmp.eq.s32.totalorder %s16, 0
    %p79 = por %p77, %p78
    %p80 = scmp.ne.s32.totalorder %s68, %s69
    %p81 = scmp.eq.s32.totalorder %s17, 1
    %p82 = por %p80, %p81
    %p84 = scmp.ne.s32.totalorder %s69, %s83
    %p85 = scmp.eq.s32.totalorder %s17, 0
    %p86 = por %p84, %p85
    %s88 = sadd.s32 %s87, 1
    %p91 = scmp.eq.s32.totalorder %s11, 1
    %p92 = scmp.ne.s32.totalorder %s87, %s89
    %p93 = scmp.eq.s32.totalorder %s11, 0
    %p94 = por %p92, %p93
    %p95 = scmp.ne.s32.totalorder %s87, %s89
    %p96 = scmp.eq.s32.totalorder %s16, 1
    %p97 = por %p95, %p96
    %p98 = scmp.ne.s32.totalorder %s89, %s90
    %p99 = scmp.eq.s32.totalorder %s16, 0
    %p100 = por %p98, %p99
    %p101 = scmp.ne.s32.totalorder %s89, %s90
    %p102 = scmp.eq.s32.totalorder %s17, 1
    %p103 = por %p101, %p102
    %p105 = scmp.ne.s32.totalorder %s90, %s104
    %p106 = scmp.eq.s32.totalorder %s17, 0
    %p107 = por %p105, %p106
    %s109 = sadd.s32 %s108, 1
    %p112 = scmp.eq.s32.totalorder %s11, 1
    %p113 = scmp.ne.s32.totalorder %s108, %s110
    %p114 = scmp.eq.s32.totalorder %s11, 0
    %p115 = por %p113, %p114
    %p116 = scmp.ne.s32.totalorder %s108, %s110
    %p117 = scmp.eq.s32.totalorder %s16, 1
    %p118 = por %p116, %p117
    %p119 = scmp.ne.s32.totalorder %s110, %s111
    %p120 = scmp.eq.s32.totalorder %s16, 0
    %p121 = por %p119, %p120
    %p122 = scmp.ne.s32.totalorder %s110, %s111
    %p123 = scmp.eq.s32.totalorder %s17, 1
    %p124 = por %p122, %p123
    %p126 = scmp.ne.s32.totalorder %s111, %s125
    %p127 = scmp.eq.s32.totalorder %s17, 0
    %p128 = por %p126, %p127
    %s129 = ssub.s32 %s11, %s18
    %p130 = scmp.eq.s32.totalorder %s129, 0
    %s132 = sadd.s32 %s131, 1
    %s133 = scalar_select %p130, %s131, %s132
    %p136 = pneg %p130
    %p137 = scmp.eq.s32.totalorder %s11, 1
    %p138 = por %p136, %p137
    %p139 = scmp.ne.s32.totalorder %s131, %s134
    %p140 = scmp.eq.s32.totalorder %s11, 0
    %p141 = por %p139, %p140
    %p142 = scmp.ne.s32.totalorder %s131, %s134
    %p143 = scmp.eq.s32.totalorder %s16, 1
    %p144 = por %p142, %p143
    %p145 = scmp.ne.s32.totalorder %s134, %s135
    %p146 = scmp.eq.s32.totalorder %s16, 0
    %p147 = por %p145, %p146
    %p148 = scmp.ne.s32.totalorder %s134, %s135
    %p149 = scmp.eq.s32.totalorder %s17, 1
    %p150 = por %p148, %p149
    %p152 = scmp.ne.s32.totalorder %s135, %s151
    %p153 = scmp.eq.s32.totalorder %s17, 0
    %p154 = por %p152, %p153
    %p155 = scmp.le.s32.totalorder 1, %s11
    %p156 = scmp.lt.s32.totalorder %s11, 3
    %p157 = pnand %p155, %p156
    %p158 = pneg %p157
    // Predicated region
    $region9: #{ghost_module_forward.1} parent=5 // pred_check
      _
    $region10: #{ghost_module_forward.1} parent=5 // pred_check_branch
      %160 = sbr.rel (%p157) target = $region12
    $region11: #{ghost_module_forward.1} parent=5 // pred_region
      %s161 = ssub.s32 %s11, 1
      // Predicated region
      $region13: #{ghost_module_forward.1} parent=11 // pred_check
        %p162 = pneg %p58
      $region14: #{ghost_module_forward.1} parent=11 // pred_check_branch
        %164 = sbr.rel (%p162) target = $region16
      $region15: #{ghost_module_forward.1} parent=11 // pred_region
        _
      $region16: #{ghost_module_forward.1} parent=11 // pred_fallthru
        _
      // Predicated region
      $region17: #{ghost_module_forward.1} parent=11 // pred_check
        %p165 = pneg %p79
      $region18: #{ghost_module_forward.1} parent=11 // pred_check_branch
        %167 = sbr.rel (%p165) target = $region20
      $region19: #{ghost_module_forward.1} parent=11 // pred_region
        _
      $region20: #{ghost_module_forward.1} parent=11 // pred_fallthru
        _
      // Predicated region
      $region21: #{ghost_module_forward.1} parent=11 // pred_check
        %p168 = pneg %p100
      $region22: #{ghost_module_forward.1} parent=11 // pred_check_branch
        %170 = sbr.rel (%p168) target = $region24
      $region23: #{ghost_module_forward.1} parent=11 // pred_region
        _
      $region24: #{ghost_module_forward.1} parent=11 // pred_fallthru
        _
      // Predicated region
      $region25: #{ghost_module_forward.1} parent=11 // pred_check
        %p171 = pneg %p121
      $region26: #{ghost_module_forward.1} parent=11 // pred_check_branch
        %173 = sbr.rel (%p171) target = $region28
      $region27: #{ghost_module_forward.1} parent=11 // pred_region
        _
      $region28: #{ghost_module_forward.1} parent=11 // pred_fallthru
        _
    $region12: #{ghost_module_forward.1} parent=5 // pred_fallthru
      _
    %p174 = scmp.lt.s32.totalorder %s11, 2
    // Predicated region
    $region29: #{ghost_module_forward.1} parent=5 // pred_check
      %p175 = pneg %p174
    $region30: #{ghost_module_forward.1} parent=5 // pred_check_branch
      %177 = sbr.rel (%p175) target = $region32
    $region31: #{ghost_module_forward.1} parent=5 // pred_region
      // Predicated region
      $region33: #{ghost_module_forward.1} parent=31 // pred_check
        %p178 = pneg %p31
      $region34: #{ghost_module_forward.1} parent=31 // pred_check_branch
        %180 = sbr.rel (%p178) target = $region36
      $region35: #{ghost_module_forward.1} parent=31 // pred_region
        %p181 = scmp.lt.s32.totalorder %s11, 1
        %s182 = scalar_select %p181, %s11, 1
        %s183 = smul.addr %s182, 2
        %s184 = smul.addr %s183, 4
        %s185 = scalar_lea.vmem %s0, %s184
      $region36: #{ghost_module_forward.1} parent=31 // pred_fallthru
        _
    $region32: #{ghost_module_forward.1} parent=5 // pred_fallthru
      _
    %p186 = scmp.le.s32.totalorder 1, %s11
    %p187 = scmp.lt.s32.totalorder %s11, 3
    %p188 = pnand %p186, %p187
    %p189 = pneg %p188
    // Predicated region
    $region37: #{ghost_module_forward.1} parent=5 // pred_check
      _
    $region38: #{ghost_module_forward.1} parent=5 // pred_check_branch
      %191 = sbr.rel (%p188) target = $region40
    $region39: #{ghost_module_forward.1} parent=5 // pred_region
      %s192 = ssub.s32 %s11, 1
      %p193 = scmp.lt.s32.totalorder %s16, 1
      %s194 = scalar_select %p193, %s16, 1
      %s195 = smul.addr %s194, 2
      %s196 = smul.addr %s195, 4
      %s197 = scalar_lea.vmem %s0, %s196
      %p198 = pneg %p37
      %p199 = pneg %p34
      %p200 = pneg %p58
      %p201 = pneg %p55
      %p202 = pneg %p79
      %p203 = pneg %p76
      %p204 = pneg %p100
      %p205 = pneg %p97
      %p206 = pneg %p121
      %p207 = pneg %p118
      %p208 = pneg %p147
      %p209 = pneg %p144
      %p210 = scmp.lt.s32.totalorder %s16, 1
      %s211 = scalar_select %p210, %s16, 1
      %s212 = smul.addr %s211, 2
      %s213 = smul.addr %s212, 8
      %s214 = scalar_lea.vmem %s5, %s213
      %p215 = scmp.lt.s32.totalorder %s16, 1
      %s216 = scalar_select %p215, %s16, 1
      %s217 = smul.addr %s216, 2
      %s218 = smul.addr %s217, 4
      %s219 = scalar_lea.vmem %s0, %s218
      %p220 = scmp.lt.s32.totalorder %s16, 1
      %s221 = scalar_select %p220, %s16, 1
      %s222 = smul.addr %s221, 2
      %s223 = smul.addr %s222, 8
      %s224 = scalar_lea.vmem %s5, %s223
      %v225 = vld [vmem:[%s219] sm:$0xff]
      %v226 = vld [vmem:[%s1] sm:$0xf]
      %228 = vset.pattern.permute.xlu0 0
      %229 = vperm.xlu0 %228, %v226
      %v230 = vpop.permute.xlu0 %229
      %v233 = vperm.slane %v225, 0
      %v234 = vperm.slane %v225, 4
      %v237 = vperm.slane %v233, 0
      %v238 = vperm.slane %v234, 0
      %v239 = vmul.f32 %v230, %v237
      %v240 = vmul.f32 %v230, %v238
      %241 = vset.pattern.permute.xlu0 1
      %242 = vperm.xlu0 %241, %v226
      %v243 = vpop.permute.xlu0 %242
      %v245 = vperm.slane %v225, 1
      %v246 = vperm.slane %v225, 5
      %v249 = vperm.slane %v245, 1
      %v250 = vperm.slane %v246, 1
      %v251 = vmul.f32 %v243, %v249
      %v252 = vmul.f32 %v243, %v250
      %v253 = vadd.f32 %v239, %v251
      %v254 = vadd.f32 %v240, %v252
      %255 = vset.pattern.permute.xlu0 2
      %256 = vperm.xlu0 %255, %v226
      %v257 = vpop.permute.xlu0 %256
      %v259 = vperm.slane %v225, 2
      %v260 = vperm.slane %v225, 6
      %v263 = vperm.slane %v259, 2
      %v264 = vperm.slane %v260, 2
      %v265 = vmul.f32 %v257, %v263
      %v266 = vmul.f32 %v257, %v264
      %v267 = vadd.f32 %v253, %v265
      %v268 = vadd.f32 %v254, %v266
      %269 = vset.pattern.permute.xlu0 3
      %270 = vperm.xlu0 %269, %v226
      %v271 = vpop.permute.xlu0 %270
      %v273 = vperm.slane %v225, 3
      %v274 = vperm.slane %v225, 7
      %v277 = vperm.slane %v273, 3
      %v278 = vperm.slane %v274, 3
      %v279 = vmul.f32 %v271, %v277
      %v280 = vmul.f32 %v271, %v278
      %v281 = vadd.f32 %v267, %v279
      %v282 = vadd.f32 %v268, %v280
      %v283 = vld [vmem:[%s2] sm:$0xf]
      %285 = vset.pattern.permute.xlu0 0
      %286 = vperm.xlu0 %285, %v283
      %v287 = vpop.permute.xlu0 %286
      %v289 = vadd.f32 %v281, %v287
      %v290 = vadd.f32 %v282, %v287
      %v291 = vmax.f32 %v289, 0.0
      %v292 = vmax.f32 %v290, 0.0
      %s293 = scalar_lea.vmem %s3, 32
      %v294 = vld [vmem:[%s293] sm:$0xff]
      %296 = vst [vmem:[#allocation1] ss:$2 sm:$0xff] %v294
      %v297 = vld.sshfl [vmem:[#allocation1] sm:$0xff pattern:$0x75316420]
      %v298 = vld.sshfl [vmem:[#allocation1 + $0x8] sm:$0xff pattern:$0x75316420]
      %v301 = vmul.f32 %v291, %v297
      %v302 = vmul.f32 %v292, %v298
      %303 = vrot.lane.b32.xlu0 %v291, 17
      %v304 = vpop.permute.xlu0 %303
      %305 = vrot.lane.b32.xlu0 %v292, 17
      %v306 = vpop.permute.xlu0 %305
      %v307 = vlaneseq
      %v308 = vand.u32 %v307, 127
      %vm309 = vcmp.lt.s32.totalorder %v308, 17
      %v310 = vsel %vm309, %v304, %v306
      %v311 = vsel %vm309, %v306, %v304
      %v312 = vld [vmem:[%s3] sm:$0xff]
      %314 = vst [vmem:[#allocation1] ss:$2 sm:$0xff] %v312
      %v315 = vld.sshfl [vmem:[#allocation1] sm:$0xff pattern:$0x75316420]
      %v316 = vld.sshfl [vmem:[#allocation1 + $0x8] sm:$0xff pattern:$0x75316420]
      %v319 = vmul.f32 %v311, %v315
      %v320 = vmul.f32 %v310, %v316
      %v321 = vadd.f32 %v301, %v319
      %v322 = vadd.f32 %v302, %v320
      %323 = vrot.lane.b32.xlu0 %v291, 16
      %v324 = vpop.permute.xlu0 %323
      %325 = vrot.lane.b32.xlu0 %v292, 16
      %v326 = vpop.permute.xlu0 %325
      %vm327 = vcmp.lt.s32.totalorder %v308, 16
      %v328 = vsel %vm327, %v324, %v326
      %v329 = vsel %vm327, %v326, %v324
      %s330 = scalar_lea.vmem %s3, 8
      %v331 = vld [vmem:[%s330] sm:$0xff]
      %333 = vst [vmem:[#allocation1] ss:$2 sm:$0xff] %v331
      %v334 = vld.sshfl [vmem:[#allocation1] sm:$0xff pattern:$0x75316420]
      %v335 = vld.sshfl [vmem:[#allocation1 + $0x8] sm:$0xff pattern:$0x75316420]
      %v338 = vmul.f32 %v329, %v334
      %v339 = vmul.f32 %v328, %v335
      %v340 = vadd.f32 %v321, %v338
      %v341 = vadd.f32 %v322, %v339
      %342 = vrot.lane.b32.xlu0 %v291, 15
      %v343 = vpop.permute.xlu0 %342
      %344 = vrot.lane.b32.xlu0 %v292, 15
      %v345 = vpop.permute.xlu0 %344
      %vm346 = vcmp.lt.s32.totalorder %v308, 15
      %v347 = vsel %vm346, %v343, %v345
      %v348 = vsel %vm346, %v345, %v343
      %s349 = scalar_lea.vmem %s3, 16
      %v350 = vld [vmem:[%s349] sm:$0xff]
      %352 = vst [vmem:[#allocation1] ss:$2 sm:$0xff] %v350
      %v353 = vld.sshfl [vmem:[#allocation1] sm:$0xff pattern:$0x75316420]
      %v354 = vld.sshfl [vmem:[#allocation1 + $0x8] sm:$0xff pattern:$0x75316420]
      %v357 = vmul.f32 %v348, %v353
      %v358 = vmul.f32 %v347, %v354
      %v359 = vadd.f32 %v340, %v357
      %v360 = vadd.f32 %v341, %v358
      %361 = vrot.lane.b32.xlu0 %v291, 1
      %v362 = vpop.permute.xlu0 %361
      %363 = vrot.lane.b32.xlu0 %v292, 1
      %v364 = vpop.permute.xlu0 %363
      %vm365 = vcmp.lt.s32.totalorder %v308, 1
      %v366 = vsel %vm365, %v362, %v364
      %v367 = vsel %vm365, %v364, %v362
      %s368 = scalar_lea.vmem %s3, 24
      %v369 = vld [vmem:[%s368] sm:$0xff]
      %371 = vst [vmem:[#allocation1] ss:$2 sm:$0xff] %v369
      %v372 = vld.sshfl [vmem:[#allocation1] sm:$0xff pattern:$0x75316420]
      %v373 = vld.sshfl [vmem:[#allocation1 + $0x8] sm:$0xff pattern:$0x75316420]
      %v376 = vmul.f32 %v367, %v372
      %v377 = vmul.f32 %v366, %v373
      %v378 = vadd.f32 %v359, %v376
      %v379 = vadd.f32 %v360, %v377
      %380 = vrot.lane.b32.xlu0 %v291, 127
      %v381 = vpop.permute.xlu0 %380
      %382 = vrot.lane.b32.xlu0 %v292, 127
      %v383 = vpop.permute.xlu0 %382
      %vm384 = vcmp.lt.s32.totalorder %v308, 127
      %v385 = vsel %vm384, %v381, %v383
      %v386 = vsel %vm384, %v383, %v381
      %s387 = scalar_lea.vmem %s3, 40
      %v388 = vld [vmem:[%s387] sm:$0xff]
      %390 = vst [vmem:[#allocation1] ss:$2 sm:$0xff] %v388
      %v391 = vld.sshfl [vmem:[#allocation1] sm:$0xff pattern:$0x75316420]
      %v392 = vld.sshfl [vmem:[#allocation1 + $0x8] sm:$0xff pattern:$0x75316420]
      %v395 = vmul.f32 %v385, %v391
      %v396 = vmul.f32 %v386, %v392
      %v397 = vadd.f32 %v378, %v395
      %v398 = vadd.f32 %v379, %v396
      %399 = vrot.lane.b32.xlu0 %v291, 113
      %v400 = vpop.permute.xlu0 %399
      %401 = vrot.lane.b32.xlu0 %v292, 113
      %v402 = vpop.permute.xlu0 %401
      %vm403 = vcmp.lt.s32.totalorder %v308, 113
      %v404 = vsel %vm403, %v400, %v402
      %v405 = vsel %vm403, %v402, %v400
      %s406 = scalar_lea.vmem %s3, 48
      %v407 = vld [vmem:[%s406] sm:$0xff]
      %409 = vst [vmem:[#allocation1] ss:$2 sm:$0xff] %v407
      %v410 = vld.sshfl [vmem:[#allocation1] sm:$0xff pattern:$0x75316420]
      %v411 = vld.sshfl [vmem:[#allocation1 + $0x8] sm:$0xff pattern:$0x75316420]
      %v414 = vmul.f32 %v404, %v410
      %v415 = vmul.f32 %v405, %v411
      %v416 = vadd.f32 %v397, %v414
      %v417 = vadd.f32 %v398, %v415
      %418 = vrot.lane.b32.xlu0 %v291, 112
      %v419 = vpop.permute.xlu0 %418
      %420 = vrot.lane.b32.xlu0 %v292, 112
      %v421 = vpop.permute.xlu0 %420
      %vm422 = vcmp.lt.s32.totalorder %v308, 112
      %v423 = vsel %vm422, %v419, %v421
      %v424 = vsel %vm422, %v421, %v419
      %s425 = scalar_lea.vmem %s3, 56
      %v426 = vld [vmem:[%s425] sm:$0xff]
      %428 = vst [vmem:[#allocation1] ss:$2 sm:$0xff] %v426
      %v429 = vld.sshfl [vmem:[#allocation1] sm:$0xff pattern:$0x75316420]
      %v430 = vld.sshfl [vmem:[#allocation1 + $0x8] sm:$0xff pattern:$0x75316420]
      %v433 = vmul.f32 %v423, %v429
      %v434 = vmul.f32 %v424, %v430
      %v435 = vadd.f32 %v416, %v433
      %v436 = vadd.f32 %v417, %v434
      %437 = vrot.lane.b32.xlu0 %v291, 111
      %v438 = vpop.permute.xlu0 %437
      %439 = vrot.lane.b32.xlu0 %v292, 111
      %v440 = vpop.permute.xlu0 %439
      %vm441 = vcmp.lt.s32.totalorder %v308, 111
      %v442 = vsel %vm441, %v438, %v440
      %v443 = vsel %vm441, %v440, %v438
      %s444 = scalar_lea.vmem %s3, 64
      %v445 = vld [vmem:[%s444] sm:$0xff]
      %447 = vst [vmem:[#allocation1] ss:$2 sm:$0xff] %v445
      %v448 = vld.sshfl [vmem:[#allocation1] sm:$0xff pattern:$0x75316420]
      %v449 = vld.sshfl [vmem:[#allocation1 + $0x8] sm:$0xff pattern:$0x75316420]
      %v452 = vmul.f32 %v442, %v448
      %v453 = vmul.f32 %v443, %v449
      %v454 = vadd.f32 %v435, %v452
      %v455 = vadd.f32 %v436, %v453
      %v456 = vld [vmem:[%s4] sm:$0xf]
      %458 = vset.pattern.permute.xlu0 0
      %459 = vperm.xlu0 %458, %v456
      %v460 = vpop.permute.xlu0 %459
      %v462 = vadd.f32 %v454, %v460
      %v463 = vadd.f32 %v455, %v460
      %v464 = vmax.f32 %v462, 0.0
      %v465 = vmax.f32 %v463, 0.0
      %466 = vst [vmem:[%s224] sm:$0xf] %v291
      %467 = vst [vmem:[%s224 + $0x8] sm:$0xf] %v292
      %v470 = vrot.slane %v464, 4
      %v471 = vrot.slane %v465, 4
      %474 = vst [vmem:[%s224] sm:$0xf0] %v470
      %475 = vst [vmem:[%s224 + $0x8] sm:$0xf0] %v471
      %p476 = scmp.lt.s32.totalorder %s16, 1
      %s477 = scalar_select %p476, %s16, 1
      %s478 = smul.addr %s477, 2
      %s479 = smul.addr %s478, 8
      %s480 = scalar_lea.vmem %s5, %s479
      // Predicated region
      $region41: #{ghost_module_forward.1} parent=39 // pred_check
        %p481 = pneg %p144
      $region42: #{ghost_module_forward.1} parent=39 // pred_check_branch
        %483 = sbr.rel (%p481) target = $region44
      $region43: #{ghost_module_forward.1} parent=39 // pred_region
        _
      $region44: #{ghost_module_forward.1} parent=39 // pred_fallthru
        _
    $region40: #{ghost_module_forward.1} parent=5 // pred_fallthru
      _
    %p484 = scmp.le.s32.totalorder 2, %s11
    // Predicated region
    $region45: #{ghost_module_forward.1} parent=5 // pred_check
      %p485 = pneg %p484
    $region46: #{ghost_module_forward.1} parent=5 // pred_check_branch
      %487 = sbr.rel (%p485) target = $region48
    $region47: #{ghost_module_forward.1} parent=5 // pred_region
      %s488 = ssub.s32 %s11, 2
      // Predicated region
      $region49: #{ghost_module_forward.1} parent=47 // pred_check
        %p489 = pneg %p150
      $region50: #{ghost_module_forward.1} parent=47 // pred_check_branch
        %491 = sbr.rel (%p489) target = $region52
      $region51: #{ghost_module_forward.1} parent=47 // pred_region
        %p492 = scmp.lt.s32.totalorder %s17, 1
        %s493 = scalar_select %p492, %s17, 1
        %s494 = smul.addr %s493, 2
        %s495 = smul.addr %s494, 8
        %s496 = scalar_lea.vmem %s5, %s495
      $region52: #{ghost_module_forward.1} parent=47 // pred_fallthru
        _
    $region48: #{ghost_module_forward.1} parent=5 // pred_fallthru
      _
  $region6: #{ghost_module_forward.1} parent=0 // loop_footer
    %s15 = sadd.s32 1, %s11
  $region7: #{ghost_module_forward.1} parent=0 // loop_footer_branch
    %10 = sbr.rel target = $region3
  $region8: #{ghost_module_forward.1} parent=0 // loop_exit
    _

</llo_original>
